<compile_context>
chip_gen: v5e
topology: v5e:2x2
jax: 0.10.0
libtpu: 0.0.40
codegen_flags: <defaults>
</compile_context>

<pallas_src>
import numpy as np
import jax
import jax.numpy as jnp
from jax import lax
from jax.experimental import pallas as pl
from jax.experimental.pallas import tpu as pltpu


def _reflect_upsample_map(n_orig, u, pad, length):
    """Padded-axis index -> original-resolution index, for reflection-pad(pad)
    applied after nearest-upsample(u) of an axis of length n_orig."""
    n_up = n_orig * u
    j = np.arange(length) - pad
    j = np.abs(j)
    j = np.where(j >= n_up, 2 * n_up - 2 - j, j)
    return (j // u).astype(np.int32)


# ---------------------------------------------------------------------------
# Pallas-backed forward
# ---------------------------------------------------------------------------
def upsample_conv_forward(x, weight, bias, *, kernel_size, stride=1, upsample=None):
    """UpsampleConvLayer.forward.

    x:      (B, Cin, H, W)  float32, NCHW (PyTorch layout)
    weight: (Cout, Cin, ks, ks)  (PyTorch OIHW layout)
    bias:   (Cout,)
    """
    ks = kernel_size
    assert ks % 2 == 1, "odd kernel_size expected (reflection pad = ks//2)"
    B, Cin, H, W = x.shape
    Cout = weight.shape[0]
    u = int(upsample) if upsample else 1
    pad = ks // 2

    Hu, Wu = H * u, W * u                    # after nearest upsample
    Hp, Wp = Hu + 2 * pad, Wu + 2 * pad      # after reflection pad
    Hd, Wd = Hp - (ks - 1), Wp - (ks - 1)    # dense (stride-1) conv output
    K = ks * ks * Cin                        # folded contraction depth

    # ---- row-tile size R from a VMEM budget (<= ~8 MiB / block, v7x-safe) ----
    per_row = Wp * (2 * Cin * 2 + K * 2 + 3 * Cout * 4)  # in(x2,bf16)+taps(bf16)+out/acc(f32)
    budget = 8 * 1024 * 1024
    R = int(max(1, min(Hd, budget // max(per_row, 1))))  # dense output rows per tile
    T = -(-Hd // R)                                       # number of row tiles
    Rt = R + ks                        # halo rows (+1 extra row for the wide-column trick)
    Nwt = R * Wp                       # flattened "wide" output length per tile
    Lt = Rt * Wp                       # flattened input length per tile

    # ---- fused gather: nearest-upsample + reflection pad + halo row tiles ----
    row_map = _reflect_upsample_map(H, u, pad, Hp)        # (Hp,)  padded row -> orig row
    col_map = _reflect_upsample_map(W, u, pad, Wp)        # (Wp,)  padded col -> orig col
    prow = np.minimum(np.arange(T)[:, None] * R + np.arange(Rt)[None, :], Hp - 1)
    ridx = row_map[prow]                                  # (T, Rt) original-row indices
    cin_ix = np.arange(Cin, dtype=np.int32)

    xb = x.astype(jnp.bfloat16)
    xg = xb[:, cin_ix[None, :, None], ridx[:, None, :], :]   # (B, T, Cin, Rt, W)
    xg = xg[..., col_map]                                     # (B, T, Cin, Rt, Wp)
    xf = xg.reshape(B, T, Cin, Lt)                            # free trailing-dim merge

    # Lane-dense resident weight tile, column order (dh, dw, cin) to match taps.
    wmat = jnp.transpose(weight, (0, 2, 3, 1)).reshape(Cout, K).astype(jnp.bfloat16)
    b2 = bias.reshape(Cout, 1).astype(jnp.float32)

    # ---- Pallas kernel: stack taps once, one K-folded MXU matmul per tile ----
    def kernel(x_ref, w_ref, b_ref, o_ref, taps_ref):
        for dh in range(ks):                         # static unroll over taps
            for dw in range(ks):
                k = dh * ks + dw
                off = dh * Wp + dw                   # static lane offset of this tap
                taps_ref[k * Cin:(k + 1) * Cin, :] = x_ref[0, 0, :, off:off + Nwt]
        acc = jnp.dot(w_ref[...], taps_ref[...],     # (Cout, K) x (K, Nwt)
                      preferred_element_type=jnp.float32)
        o_ref[0, 0] = (acc + b_ref[...]).astype(o_ref.dtype)

    wide = pl.pallas_call(
        kernel,
        out_shape=jax.ShapeDtypeStruct((B, T, Cout, Nwt), jnp.float32),
        grid=(B, T),
        in_specs=[
            pl.BlockSpec((1, 1, Cin, Lt), lambda n, t: (n, t, 0, 0)),
            pl.BlockSpec((Cout, K), lambda n, t: (0, 0)),
            pl.BlockSpec((Cout, 1), lambda n, t: (0, 0)),
        ],
        out_specs=pl.BlockSpec((1, 1, Cout, Nwt), lambda n, t: (n, t, 0, 0)),
        scratch_shapes=[pltpu.VMEM((K, Nwt), jnp.bfloat16)],
        compiler_params=pltpu.CompilerParams(
            dimension_semantics=("parallel", "parallel"),
            vmem_limit_bytes=48 * 1024 * 1024),
    )(xf, wmat, b2)

    # Un-tile, trim the (ks-1) wide junk columns + tail junk rows, apply stride.
    dense = (jnp.transpose(wide.reshape(B, T, Cout, R, Wp), (0, 2, 1, 3, 4))
             .reshape(B, Cout, T * R, Wp)[:, :, :Hd, :Wd])
    return dense[:, :, ::stride, ::stride]


# ---------------------------------------------------------------------------
# Pure-JAX reference (correctness check)
# ---------------------------------------------------------------------------
def _ref_forward(x, weight, bias, *, kernel_size, stride=1, upsample=None):
    if upsample:
        x = jnp.repeat(jnp.repeat(x, int(upsample), axis=2), int(upsample), axis=3)
    pad = kernel_size // 2
    xp = jnp.pad(x, ((0, 0), (0, 0), (pad, pad), (pad, pad)), mode="reflect")
    out = lax.conv_general_dilated(
        xp, weight, (stride, stride), "VALID",
        dimension_numbers=("NCHW", "OIHW", "NCHW"))
    return out + bias[None, :, None, None]


# ---------------------------------------------------------------------------
# Main
# ---------------------------------------------------------------------------
if __name__ == "__main__":
    B, Cin, H, W = 2, 4, 16, 16
    Cout, ks = 8, 3

    key = jax.random.PRNGKey(0)
    kx, kw, kb = jax.random.split(key, 3)
    x = jax.random.normal(kx, (B, Cin, H, W), jnp.float32)            # NCHW
    weight = 0.1 * jax.random.normal(kw, (Cout, Cin, ks, ks), jnp.float32)
    bias = 0.1 * jax.random.normal(kb, (Cout,), jnp.float32)

    # Typical style-transfer decoder config: nearest upsample x2, stride 1.
    out = jax.block_until_ready(
        upsample_conv_forward(x, weight, bias, kernel_size=ks, stride=1, upsample=2))
    ref = jax.block_until_ready(
        _ref_forward(x, weight, bias, kernel_size=ks, stride=1, upsample=2))
    assert out.shape == ref.shape == (B, Cout, 2 * H, 2 * W)
    assert out.dtype == jnp.float32
    assert jnp.allclose(out, ref, atol=3e-2, rtol=3e-2), (
        float(jnp.max(jnp.abs(out - ref))))

    # No-upsample, strided config (exercises the stride path).
    out2 = jax.block_until_ready(
        upsample_conv_forward(x, weight, bias, kernel_size=ks, stride=2, upsample=None))
    ref2 = _ref_forward(x, weight, bias, kernel_size=ks, stride=2, upsample=None)
    assert out2.shape == ref2.shape == (B, Cout, H // 2, W // 2)
    assert jnp.allclose(out2, ref2, atol=3e-2, rtol=3e-2), (
        float(jnp.max(jnp.abs(out2 - ref2))))

    print("KERNEL_OK")
</pallas_src>

<mosaic_0001>
module attributes {stable_mosaic.version = 11 : i64} {
  func.func @kernel(%arg0: i32, %arg1: i32, %arg2: memref<1x1x4x1190xbf16, #tpu.memory_space<vmem>>, %arg3: memref<8x36xbf16, #tpu.memory_space<vmem>>, %arg4: memref<8x1xf32, #tpu.memory_space<vmem>>, %arg5: memref<1x1x8x1088xf32, #tpu.memory_space<vmem>>, %arg6: memref<36x1088xbf16, #tpu.memory_space<vmem>>) attributes {dimension_semantics = [#tpu.dimension_semantics<parallel>, #tpu.dimension_semantics<parallel>], iteration_bounds = array<i64: 2, 1>, scalar_prefetch = 0 : i64, scratch_operands = 1 : i64, tpu.core_type = #tpu.core_type<tc>, window_params = [{transform_indices = @transform_0, window_bounds = array<i64: 1, 1, 4, 1190>}, {pipeline_mode = #tpu.pipeline_mode<synchronous>, transform_indices = @transform_1, window_bounds = array<i64: 8, 36>}, {pipeline_mode = #tpu.pipeline_mode<synchronous>, transform_indices = @transform_2, window_bounds = array<i64: 8, 1>}, {transform_indices = @transform_3, window_bounds = array<i64: 1, 1, 8, 1088>}]} {
    %c0 = arith.constant 0 : index
    %c0_0 = arith.constant 0 : index
    %c0_1 = arith.constant 0 : index
    %c0_2 = arith.constant 0 : index
    %0 = vector.load %arg2[%c0, %c0_0, %c0_1, %c0_2] : memref<1x1x4x1190xbf16, #tpu.memory_space<vmem>>, vector<1x1x4x1088xbf16>
    %1 = vector.shape_cast %0 : vector<1x1x4x1088xbf16> to vector<4x1088xbf16>
    %c0_3 = arith.constant 0 : index
    %c0_4 = arith.constant 0 : index
    %2 = vector.load %arg6[%c0_3, %c0_4] : memref<36x1088xbf16, #tpu.memory_space<vmem>>, vector<4x1088xbf16>
    tpu.vector_store %arg6[%c0_3, %c0_4], %1 {strides = array<i32>} : memref<36x1088xbf16, #tpu.memory_space<vmem>>, vector<4x1088xbf16>,
    %c0_5 = arith.constant 0 : index
    %c0_6 = arith.constant 0 : index
    %c0_7 = arith.constant 0 : index
    %c1 = arith.constant 1 : index
    %3 = vector.load %arg2[%c0_5, %c0_6, %c0_7, %c1] : memref<1x1x4x1190xbf16, #tpu.memory_space<vmem>>, vector<1x1x4x1088xbf16>
    %4 = vector.shape_cast %3 : vector<1x1x4x1088xbf16> to vector<4x1088xbf16>
    %c4 = arith.constant 4 : index
    %c0_8 = arith.constant 0 : index
    %5 = vector.load %arg6[%c4, %c0_8] : memref<36x1088xbf16, #tpu.memory_space<vmem>>, vector<4x1088xbf16>
    tpu.vector_store %arg6[%c4, %c0_8], %4 {strides = array<i32>} : memref<36x1088xbf16, #tpu.memory_space<vmem>>, vector<4x1088xbf16>,
    %c0_9 = arith.constant 0 : index
    %c0_10 = arith.constant 0 : index
    %c0_11 = arith.constant 0 : index
    %c2 = arith.constant 2 : index
    %6 = vector.load %arg2[%c0_9, %c0_10, %c0_11, %c2] : memref<1x1x4x1190xbf16, #tpu.memory_space<vmem>>, vector<1x1x4x1088xbf16>
    %7 = vector.shape_cast %6 : vector<1x1x4x1088xbf16> to vector<4x1088xbf16>
    %c8 = arith.constant 8 : index
    %c0_12 = arith.constant 0 : index
    %8 = vector.load %arg6[%c8, %c0_12] : memref<36x1088xbf16, #tpu.memory_space<vmem>>, vector<4x1088xbf16>
    tpu.vector_store %arg6[%c8, %c0_12], %7 {strides = array<i32>} : memref<36x1088xbf16, #tpu.memory_space<vmem>>, vector<4x1088xbf16>,
    %c0_13 = arith.constant 0 : index
    %c0_14 = arith.constant 0 : index
    %c0_15 = arith.constant 0 : index
    %c34 = arith.constant 34 : index
    %9 = vector.load %arg2[%c0_13, %c0_14, %c0_15, %c34] : memref<1x1x4x1190xbf16, #tpu.memory_space<vmem>>, vector<1x1x4x1088xbf16>
    %10 = vector.shape_cast %9 : vector<1x1x4x1088xbf16> to vector<4x1088xbf16>
    %c12 = arith.constant 12 : index
    %c0_16 = arith.constant 0 : index
    %11 = vector.load %arg6[%c12, %c0_16] : memref<36x1088xbf16, #tpu.memory_space<vmem>>, vector<4x1088xbf16>
    tpu.vector_store %arg6[%c12, %c0_16], %10 {strides = array<i32>} : memref<36x1088xbf16, #tpu.memory_space<vmem>>, vector<4x1088xbf16>,
    %c0_17 = arith.constant 0 : index
    %c0_18 = arith.constant 0 : index
    %c0_19 = arith.constant 0 : index
    %c35 = arith.constant 35 : index
    %12 = vector.load %arg2[%c0_17, %c0_18, %c0_19, %c35] : memref<1x1x4x1190xbf16, #tpu.memory_space<vmem>>, vector<1x1x4x1088xbf16>
    %13 = vector.shape_cast %12 : vector<1x1x4x1088xbf16> to vector<4x1088xbf16>
    %c16 = arith.constant 16 : index
    %c0_20 = arith.constant 0 : index
    %14 = vector.load %arg6[%c16, %c0_20] : memref<36x1088xbf16, #tpu.memory_space<vmem>>, vector<4x1088xbf16>
    tpu.vector_store %arg6[%c16, %c0_20], %13 {strides = array<i32>} : memref<36x1088xbf16, #tpu.memory_space<vmem>>, vector<4x1088xbf16>,
    %c0_21 = arith.constant 0 : index
    %c0_22 = arith.constant 0 : index
    %c0_23 = arith.constant 0 : index
    %c36 = arith.constant 36 : index
    %15 = vector.load %arg2[%c0_21, %c0_22, %c0_23, %c36] : memref<1x1x4x1190xbf16, #tpu.memory_space<vmem>>, vector<1x1x4x1088xbf16>
    %16 = vector.shape_cast %15 : vector<1x1x4x1088xbf16> to vector<4x1088xbf16>
    %c20 = arith.constant 20 : index
    %c0_24 = arith.constant 0 : index
    %17 = vector.load %arg6[%c20, %c0_24] : memref<36x1088xbf16, #tpu.memory_space<vmem>>, vector<4x1088xbf16>
    tpu.vector_store %arg6[%c20, %c0_24], %16 {strides = array<i32>} : memref<36x1088xbf16, #tpu.memory_space<vmem>>, vector<4x1088xbf16>,
    %c0_25 = arith.constant 0 : index
    %c0_26 = arith.constant 0 : index
    %c0_27 = arith.constant 0 : index
    %c68 = arith.constant 68 : index
    %18 = vector.load %arg2[%c0_25, %c0_26, %c0_27, %c68] : memref<1x1x4x1190xbf16, #tpu.memory_space<vmem>>, vector<1x1x4x1088xbf16>
    %19 = vector.shape_cast %18 : vector<1x1x4x1088xbf16> to vector<4x1088xbf16>
    %c24 = arith.constant 24 : index
    %c0_28 = arith.constant 0 : index
    %20 = vector.load %arg6[%c24, %c0_28] : memref<36x1088xbf16, #tpu.memory_space<vmem>>, vector<4x1088xbf16>
    tpu.vector_store %arg6[%c24, %c0_28], %19 {strides = array<i32>} : memref<36x1088xbf16, #tpu.memory_space<vmem>>, vector<4x1088xbf16>,
    %c0_29 = arith.constant 0 : index
    %c0_30 = arith.constant 0 : index
    %c0_31 = arith.constant 0 : index
    %c69 = arith.constant 69 : index
    %21 = vector.load %arg2[%c0_29, %c0_30, %c0_31, %c69] : memref<1x1x4x1190xbf16, #tpu.memory_space<vmem>>, vector<1x1x4x1088xbf16>
    %22 = vector.shape_cast %21 : vector<1x1x4x1088xbf16> to vector<4x1088xbf16>
    %c28 = arith.constant 28 : index
    %c0_32 = arith.constant 0 : index
    %23 = vector.load %arg6[%c28, %c0_32] : memref<36x1088xbf16, #tpu.memory_space<vmem>>, vector<4x1088xbf16>
    tpu.vector_store %arg6[%c28, %c0_32], %22 {strides = array<i32>} : memref<36x1088xbf16, #tpu.memory_space<vmem>>, vector<4x1088xbf16>,
    %c0_33 = arith.constant 0 : index
    %c0_34 = arith.constant 0 : index
    %c0_35 = arith.constant 0 : index
    %c70 = arith.constant 70 : index
    %24 = vector.load %arg2[%c0_33, %c0_34, %c0_35, %c70] : memref<1x1x4x1190xbf16, #tpu.memory_space<vmem>>, vector<1x1x4x1088xbf16>
    %25 = vector.shape_cast %24 : vector<1x1x4x1088xbf16> to vector<4x1088xbf16>
    %c32 = arith.constant 32 : index
    %c0_36 = arith.constant 0 : index
    %26 = vector.load %arg6[%c32, %c0_36] : memref<36x1088xbf16, #tpu.memory_space<vmem>>, vector<4x1088xbf16>
    tpu.vector_store %arg6[%c32, %c0_36], %25 {strides = array<i32>} : memref<36x1088xbf16, #tpu.memory_space<vmem>>, vector<4x1088xbf16>,
    %c0_37 = arith.constant 0 : index
    %c0_38 = arith.constant 0 : index
    %27 = vector.load %arg3[%c0_37, %c0_38] : memref<8x36xbf16, #tpu.memory_space<vmem>>, vector<8x36xbf16>
    %c0_39 = arith.constant 0 : index
    %c0_40 = arith.constant 0 : index
    %28 = vector.load %arg6[%c0_39, %c0_40] : memref<36x1088xbf16, #tpu.memory_space<vmem>>, vector<36x1088xbf16>
    %cst = arith.constant dense<0.000000e+00> : vector<8x1088xf32>
    %29 = tpu.matmul %27, %28, %cst {dimension_numbers = #tpu.dot_dimension_numbers<[1], [0], [0], [1], [0, 0, 1, 1], [], []>} : vector<8x36xbf16>, vector<36x1088xbf16>, vector<8x1088xf32> -> vector<8x1088xf32>
    %c0_41 = arith.constant 0 : index
    %c0_42 = arith.constant 0 : index
    %30 = vector.load %arg4[%c0_41, %c0_42] : memref<8x1xf32, #tpu.memory_space<vmem>>, vector<8x1xf32>
    %31 = vector.broadcast %30 : vector<8x1xf32> to vector<8x1088xf32>
    %32 = arith.addf %29, %31 : vector<8x1088xf32>
    %c0_43 = arith.constant 0 : index
    %c0_44 = arith.constant 0 : index
    %c0_45 = arith.constant 0 : index
    %c0_46 = arith.constant 0 : index
    %33 = vector.load %arg5[%c0_43, %c0_44, %c0_45, %c0_46] : memref<1x1x8x1088xf32, #tpu.memory_space<vmem>>, vector<1x1x8x1088xf32>
    %34 = vector.shape_cast %33 : vector<1x1x8x1088xf32> to vector<8x1088xf32>
    %35 = vector.shape_cast %32 : vector<8x1088xf32> to vector<1x1x8x1088xf32>
    tpu.vector_store %arg5[%c0_43, %c0_44, %c0_45, %c0_46], %35 {strides = array<i32>} : memref<1x1x8x1088xf32, #tpu.memory_space<vmem>>, vector<1x1x8x1088xf32>,
    return
  }
  func.func @transform_0(%arg0: i32, %arg1: i32) -> (i32, i32, i32, i32) {
    %c0_i32 = arith.constant 0 : i32
    %c0_i32_0 = arith.constant 0 : i32
    %c0_i32_1 = arith.constant 0 : i32
    return %arg0, %arg1, %c0_i32, %c0_i32_0 : i32, i32, i32, i32
  }
  func.func @transform_1(%arg0: i32, %arg1: i32) -> (i32, i32) {
    %c0_i32 = arith.constant 0 : i32
    %c0_i32_0 = arith.constant 0 : i32
    %c0_i32_1 = arith.constant 0 : i32
    return %c0_i32, %c0_i32_0 : i32, i32
  }
  func.func @transform_2(%arg0: i32, %arg1: i32) -> (i32, i32) {
    %c0_i32 = arith.constant 0 : i32
    %c0_i32_0 = arith.constant 0 : i32
    %c0_i32_1 = arith.constant 0 : i32
    return %c0_i32, %c0_i32_0 : i32, i32
  }
  func.func @transform_3(%arg0: i32, %arg1: i32) -> (i32, i32, i32, i32) {
    %c0_i32 = arith.constant 0 : i32
    %c0_i32_0 = arith.constant 0 : i32
    %c0_i32_1 = arith.constant 0 : i32
    return %arg0, %arg1, %c0_i32, %c0_i32_0 : i32, i32, i32, i32
  }
}

</mosaic_0001>

<llo_original>
// kernel: tpu_custom_call.1
$region0: #{tpu_custom_call.1}
  #allocation0 [shape = 'u32[]', space=smem, size = 0x4, offset = 0x4, fixed_abs, tag = 'smem constant byte address 0x4 - core index']
  #allocation1 [shape = 'u32[72,128]{1,0:T(1,128)}', space=vmem, size = 0x9000, scoped, tag = 'internal scratch']
  #allocation2 [shape = 'bf16[36,1088]{1,0:T(8,128)(2,1)}', space=vmem, size = 0x16800, scoped, tag = 'scratch operand']
  %s0 = inlined_call_operand.hbm [shape: bf16[2,1,4,1190], index: 0, kind: input, shape index: {}]
  %s1 = inlined_call_operand.vmem [shape: bf16[8,36], index: 1, kind: input, shape index: {}]
  %s2 = inlined_call_operand.vmem [shape: f32[8,1], index: 2, kind: input, shape index: {}]
  %s3 = inlined_call_operand.hbm [shape: f32[2,1,8,1088], index: 3, kind: output, shape index: {}]
  %s4 = sld [smem:[#allocation0]]
  $region49: #{tpu_custom_call.1} parent=0
    _
  %s6 = ssub.s32 1, %s4
  %s7 = scalar_select 0, %s6, %s4
  $region1: #{tpu_custom_call.1} parent=0
    #allocation3 [shape = 'u8[20480]{0}', space=vmem, size = 0x5000, scoped, tag = 'input window, operand 0']
    #allocation4 [shape = 's32[2]{0}', space=sflag, size = 0x8, scoped, tag = 'scoped memory for tpu_custom_call.1']
    #allocation5 [shape = 's32[2]{0}', space=sflag, size = 0x8, scoped, tag = 'scoped memory for tpu_custom_call.1']
    #allocation6 [shape = 'u8[73728]{0}', space=vmem, size = 0x12000, scoped, tag = 'output window, operand 0']
    %8 = vsyncpa [#allocation4], 0
    %s9 = scalar_lea.sflag [#allocation4], 1
    %10 = vsyncpa %s9, 0
    %11 = vsyncpa [#allocation5], 0
    %s12 = scalar_lea.sflag [#allocation5], 1
    %13 = vsyncpa %s12, 0
    loop: start=0, step=1, limit=4
    $region2: #{tpu_custom_call.1} parent=1 // loop_pre_header
      _
    $region3: #{tpu_custom_call.1} parent=1 // loop_header
      %s15 = sphi 0, %s19
      %p16 = scmp.ge.s32.totalorder %s15, 4
      %s22 = sphi 0, %s34
      %s23 = sphi 0, %s30
      %s24 = sphi 0, %s22
      %s25 = sphi 0, %s23
      %s26 = sphi 0, %s24
      %s27 = sphi 0, %s25
      %s39 = sphi 0, %s41
      %s42 = sphi 0, %s39
      %s43 = sphi 0, %s42
      %s59 = sphi 0, %s43
      %s63 = sphi 0, %s63
      %s65 = sphi 0, %s63
      %s66 = sphi 0, %s65
      %s80 = sphi 0, %s66
      %s84 = sphi 0, %s84
      %s86 = sphi 0, %s84
      %s87 = sphi 0, %s86
      %s101 = sphi 0, %s87
      %s109 = sphi 0, %s111
      %s112 = sphi 0, %s109
      %s113 = sphi 0, %s112
      %s129 = sphi 0, %s113
    $region4: #{tpu_custom_call.1} parent=1 // loop_header_branch
      %18 = sbr.rel (%p16) target = $region8
    $region5: #{tpu_custom_call.1} parent=1 // loop_body
      %s20 = ssub.s32 %s15, 1
      %s21 = ssub.s32 %s15, 2
      %s28 = sadd.s32 1, %s23
      %p29 = scmp.ge.s32.totalorder %s28, 1
      %s30 = scalar_select %p29, 0, %s28
      %s31 = sadd.s32 1, %s22
      %s32 = scalar_select %p29, %s31, %s22
      %p33 = scmp.ge.s32.totalorder %s32, 2
      %s34 = scalar_select %p33, 0, %s32
      %s35 = ssub.s32 %s22, %s34
      %s36 = ssub.s32 %s23, %s30
      %s37 = sor.u32 %s35, %s36
      %p38 = scmp.eq.s32.totalorder %s37, 0
      %s40 = sadd.s32 %s39, 1
      %s41 = scalar_select %p38, %s39, %s40
      %p44 = pneg %p38
      %p45 = scmp.eq.s32.totalorder %s15, 1
      %p46 = por %p44, %p45
      %p47 = scmp.ne.s32.totalorder %s39, %s42
      %p48 = scmp.eq.s32.totalorder %s15, 0
      %p49 = por %p47, %p48
      %p50 = scmp.ne.s32.totalorder %s39, %s42
      %p51 = scmp.eq.s32.totalorder %s20, 1
      %p52 = por %p50, %p51
      %p53 = scmp.ne.s32.totalorder %s42, %s43
      %p54 = scmp.eq.s32.totalorder %s20, 0
      %p55 = por %p53, %p54
      %p56 = scmp.ne.s32.totalorder %s42, %s43
      %p57 = scmp.eq.s32.totalorder %s21, 1
      %p58 = por %p56, %p57
      %p60 = scmp.ne.s32.totalorder %s43, %s59
      %p61 = scmp.eq.s32.totalorder %s21, 0
      %p62 = por %p60, %p61
      %s64 = sadd.s32 %s63, 1
      %p67 = scmp.eq.s32.totalorder %s15, 1
      %p68 = scmp.ne.s32.totalorder %s63, %s65
      %p69 = scmp.eq.s32.totalorder %s15, 0
      %p70 = por %p68, %p69
      %p71 = scmp.ne.s32.totalorder %s63, %s65
      %p72 = scmp.eq.s32.totalorder %s20, 1
      %p73 = por %p71, %p72
      %p74 = scmp.ne.s32.totalorder %s65, %s66
      %p75 = scmp.eq.s32.totalorder %s20, 0
      %p76 = por %p74, %p75
      %p77 = scmp.ne.s32.totalorder %s65, %s66
      %p78 = scmp.eq.s32.totalorder %s21, 1
      %p79 = por %p77, %p78
      %p81 = scmp.ne.s32.totalorder %s66, %s80
      %p82 = scmp.eq.s32.totalorder %s21, 0
      %p83 = por %p81, %p82
      %s85 = sadd.s32 %s84, 1
      %p88 = scmp.eq.s32.totalorder %s15, 1
      %p89 = scmp.ne.s32.totalorder %s84, %s86
      %p90 = scmp.eq.s32.totalorder %s15, 0
      %p91 = por %p89, %p90
      %p92 = scmp.ne.s32.totalorder %s84, %s86
      %p93 = scmp.eq.s32.totalorder %s20, 1
      %p94 = por %p92, %p93
      %p95 = scmp.ne.s32.totalorder %s86, %s87
      %p96 = scmp.eq.s32.totalorder %s20, 0
      %p97 = por %p95, %p96
      %p98 = scmp.ne.s32.totalorder %s86, %s87
      %p99 = scmp.eq.s32.totalorder %s21, 1
      %p100 = por %p98, %p99
      %p102 = scmp.ne.s32.totalorder %s87, %s101
      %p103 = scmp.eq.s32.totalorder %s21, 0
      %p104 = por %p102, %p103
      %s105 = ssub.s32 %s22, %s34
      %s106 = ssub.s32 %s23, %s30
      %s107 = sor.u32 %s105, %s106
      %p108 = scmp.eq.s32.totalorder %s107, 0
      %s110 = sadd.s32 %s109, 1
      %s111 = scalar_select %p108, %s109, %s110
      %p114 = pneg %p108
      %p115 = scmp.eq.s32.totalorder %s15, 1
      %p116 = por %p114, %p115
      %p117 = scmp.ne.s32.totalorder %s109, %s112
      %p118 = scmp.eq.s32.totalorder %s15, 0
      %p119 = por %p117, %p118
      %p120 = scmp.ne.s32.totalorder %s109, %s112
      %p121 = scmp.eq.s32.totalorder %s20, 1
      %p122 = por %p120, %p121
      %p123 = scmp.ne.s32.totalorder %s112, %s113
      %p124 = scmp.eq.s32.totalorder %s20, 0
      %p125 = por %p123, %p124
      %p126 = scmp.ne.s32.totalorder %s112, %s113
      %p127 = scmp.eq.s32.totalorder %s21, 1
      %p128 = por %p126, %p127
      %p130 = scmp.ne.s32.totalorder %s113, %s129
      %p131 = scmp.eq.s32.totalorder %s21, 0
      %p132 = por %p130, %p131
      %p133 = scmp.le.s32.totalorder 1, %s15
      %p134 = scmp.lt.s32.totalorder %s15, 3
      %p135 = pnand %p133, %p134
      %p136 = pneg %p135
      // Predicated region
      $region9: #{tpu_custom_call.1} parent=5 // pred_check
        _
      $region10: #{tpu_custom_call.1} parent=5 // pred_check_branch
        %138 = sbr.rel (%p135) target = $region12
      $region11: #{tpu_custom_call.1} parent=5 // pred_region
        %s139 = ssub.s32 %s15, 1
        // Predicated region
        $region13: #{tpu_custom_call.1} parent=11 // pred_check
          %p140 = pneg %p76
        $region14: #{tpu_custom_call.1} parent=11 // pred_check_branch
          %142 = sbr.rel (%p140) target = $region16
        $region15: #{tpu_custom_call.1} parent=11 // pred_region
          _
        $region16: #{tpu_custom_call.1} parent=11 // pred_fallthru
          _
        // Predicated region
        $region17: #{tpu_custom_call.1} parent=11 // pred_check
          %p143 = pneg %p97
        $region18: #{tpu_custom_call.1} parent=11 // pred_check_branch
          %145 = sbr.rel (%p143) target = $region20
        $region19: #{tpu_custom_call.1} parent=11 // pred_region
          _
        $region20: #{tpu_custom_call.1} parent=11 // pred_fallthru
          _
      $region12: #{tpu_custom_call.1} parent=5 // pred_fallthru
        _
      %p146 = scmp.lt.s32.totalorder %s15, 2
      // Predicated region
      $region21: #{tpu_custom_call.1} parent=5 // pred_check
        %p147 = pneg %p146
      $region22: #{tpu_custom_call.1} parent=5 // pred_check_branch
        %149 = sbr.rel (%p147) target = $region24
      $region23: #{tpu_custom_call.1} parent=5 // pred_region
        // Predicated region
        $region25: #{tpu_custom_call.1} parent=23 // pred_check
          %p150 = pneg %p49
        $region26: #{tpu_custom_call.1} parent=23 // pred_check_branch
          %152 = sbr.rel (%p150) target = $region28
        $region27: #{tpu_custom_call.1} parent=23 // pred_region
          %s153 = sand.u32 %s39, 1
          %s154 = scalar_lea.sflag [#allocation4], %s153
          %s155 = sand.u32 %s39, 1
          %s156 = smul.addr %s155, 20
          %s157 = scalar_lea.vmem [#allocation3], %s156
          %159 = vsyncadd %s154, 0
          %s160 = smul.addr %s23, 10
          %s161 = smul.addr %s22, 10
          %s162 = sadd.s32 %s160, %s161
          %s163 = smul.addr %s162, 2
          %s164 = scalar_lea.hbm %s0, %s163
          %s166 = sshll.u32 %s164, 4
          %s167 = int_to_ptr.hbm [resolvable:$true] %s166
          %s168 = sshll.u32 %s157, 4
          %s169 = int_to_ptr.vmem [resolvable:$true] %s168
          %171 = dma.hbm_to_vmem [thread:$0]  %s167, 320, %s169, %s154
        $region28: #{tpu_custom_call.1} parent=23 // pred_fallthru
          _
      $region24: #{tpu_custom_call.1} parent=5 // pred_fallthru
        _
      %p172 = scmp.le.s32.totalorder 1, %s15
      %p173 = scmp.lt.s32.totalorder %s15, 3
      %p174 = pnand %p172, %p173
      %p175 = pneg %p174
      // Predicated region
      $region29: #{tpu_custom_call.1} parent=5 // pred_check
        _
      $region30: #{tpu_custom_call.1} parent=5 // pred_check_branch
        %177 = sbr.rel (%p174) target = $region32
      $region31: #{tpu_custom_call.1} parent=5 // pred_region
        %s178 = ssub.s32 %s15, 1
        %s179 = sand.u32 %s42, 1
        %s180 = scalar_lea.sflag [#allocation4], %s179
        %s181 = sand.u32 %s42, 1
        %s182 = smul.addr %s181, 20
        %s183 = scalar_lea.vmem [#allocation3], %s182
        // Predicated region
        $region33: #{tpu_custom_call.1} parent=31 // pred_check
          %p184 = pneg %p55
        $region34: #{tpu_custom_call.1} parent=31 // pred_check_branch
          %186 = sbr.rel (%p184) target = $region36
        $region35: #{tpu_custom_call.1} parent=31 // pred_region
          %188 = dma.done %s180, 320
        $region36: #{tpu_custom_call.1} parent=31 // pred_fallthru
          _
        %s189 = sand.u32 %s42, 1
        %s190 = scalar_lea.sflag [#allocation4], %s189
        %s191 = sand.u32 %s42, 1
        %s192 = smul.addr %s191, 20
        %s193 = scalar_lea.vmem [#allocation3], %s192
        %p194 = pneg %p55
        %p195 = pneg %p52
        %p196 = pneg %p76
        %p197 = pneg %p73
        %p198 = pneg %p97
        %p199 = pneg %p94
        %p200 = pneg %p125
        %p201 = pneg %p122
        %s202 = sand.u32 %s112, 1
        %s203 = scalar_lea.sflag [#allocation5], %s202
        %s204 = sand.u32 %s112, 1
        %s205 = smul.addr %s204, 72
        %s206 = scalar_lea.vmem [#allocation6], %s205
        %v208 = vld [vmem:[%s183] sm:$0xff]
        %v209 = vld [vmem:[%s183 + $0x8] sm:$0xff]
        %v210 = vld [vmem:[%s183 + $0x10] sm:$0x3]
        %212 = vst [vmem:[#allocation1] ss:$2 sm:$0xff] %v208
        %s214 = scalar_lea.vmem [#allocation1], 16
        %215 = vst [vmem:[%s214] ss:$2 sm:$0xff] %v209
        %s217 = scalar_lea.vmem [#allocation1], 32
        %218 = vst [vmem:[%s217] ss:$2 sm:$0xff] %v210
        %v219 = vld.sshfl [vmem:[#allocation1] sm:$0xff pattern:$0x75643120]
        %v220 = vld.sshfl [vmem:[#allocation1 + $0x8] sm:$0xff pattern:$0x75643120]
        %v221 = vld.sshfl [vmem:[#allocation1 + $0x10] sm:$0xff pattern:$0x75643120]
        %v222 = vld.sshfl [vmem:[#allocation1 + $0x18] sm:$0xff pattern:$0x75643120]
        %v223 = vld.sshfl [vmem:[#allocation1 + $0x20] sm:$0xff pattern:$0x75643120]
        %229 = vst [vmem:[#allocation2] sm:$0x33] %v219
        %230 = vst [vmem:[#allocation2 + $0x8] sm:$0x33] %v220
        %231 = vst [vmem:[#allocation2 + $0x10] sm:$0x33] %v221
        %232 = vst [vmem:[#allocation2 + $0x18] sm:$0x33] %v222
        %vm233 = vcmask 517120
        %234 = vst.msk [vmem:[#allocation2 + $0x20] sm:$0x3] %vm233, %v223
        %v235 = vld [vmem:[%s183] sm:$0xff]
        %v236 = vld [vmem:[%s183 + $0x8] sm:$0xff]
        %v237 = vld [vmem:[%s183 + $0x10] sm:$0x3]
        %s239 = scalar_lea.vmem [#allocation1], 1
        %240 = vst [vmem:[%s239] ss:$2 sm:$0xff] %v235
        %s242 = scalar_lea.vmem [#allocation1], 17
        %243 = vst [vmem:[%s242] ss:$2 sm:$0xff] %v236
        %s245 = scalar_lea.vmem [#allocation1], 33
        %246 = vst [vmem:[%s245] ss:$2 sm:$0xff] %v237
        %v247 = vld.sshfl [vmem:[#allocation1] sm:$0xff pattern:$0x75643120]
        %v249 = vld.sshfl [vmem:[#allocation1 + $0x8] sm:$0xff pattern:$0x75643120]
        %v251 = vld.sshfl [vmem:[#allocation1 + $0x10] sm:$0xff pattern:$0x75643120]
        %v253 = vld.sshfl [vmem:[#allocation1 + $0x18] sm:$0xff pattern:$0x75643120]
        %v255 = vld.sshfl [vmem:[#allocation1 + $0x20] sm:$0xff pattern:$0x75643120]
        %257 = vrot.lane.b32.xlu0 %v247, 127
        %v258 = vpop.permute.xlu0 %257
        %259 = vrot.lane.b32.xlu0 %v249, 127
        %v260 = vpop.permute.xlu0 %259
        %261 = vrot.lane.b32.xlu0 %v251, 127
        %v262 = vpop.permute.xlu0 %261
        %263 = vrot.lane.b32.xlu0 %v253, 127
        %v264 = vpop.permute.xlu0 %263
        %265 = vrot.lane.b32.xlu0 %v255, 127
        %v266 = vpop.permute.xlu0 %265
        %v267 = vrot.slane %v258, 4
        %v268 = vrot.slane %v260, 4
        %v269 = vrot.slane %v262, 4
        %v270 = vrot.slane %v264, 4
        %v271 = vrot.slane %v266, 4
        %vm272 = vcmask 1043456
        %v273 = vsel %vm272, %v267, %v268
        %vm274 = vcmask 1039360
        %v275 = vsel %vm274, %v258, %v273
        %v276 = vsel %vm272, %v268, %v269
        %v277 = vsel %vm274, %v260, %v276
        %v278 = vsel %vm272, %v269, %v270
        %v279 = vsel %vm274, %v262, %v278
        %v280 = vsel %vm272, %v270, %v271
        %v281 = vsel %vm274, %v264, %v280
        %287 = vst [vmem:[#allocation2] sm:$0xcc] %v275
        %288 = vst [vmem:[#allocation2 + $0x8] sm:$0xcc] %v277
        %289 = vst [vmem:[#allocation2 + $0x10] sm:$0xcc] %v279
        %290 = vst [vmem:[#allocation2 + $0x18] sm:$0xcc] %v281
        %vm291 = vcmask 519170
        %292 = vst.msk [vmem:[#allocation2 + $0x20] sm:$0xc] %vm291, %v266
        %v293 = vld [vmem:[%s183] sm:$0xff]
        %v294 = vld [vmem:[%s183 + $0x8] sm:$0xff]
        %v295 = vld [vmem:[%s183 + $0x10] sm:$0x3]
        %297 = vst [vmem:[#allocation1] ss:$2 sm:$0xff] %v293
        %s299 = scalar_lea.vmem [#allocation1], 16
        %300 = vst [vmem:[%s299] ss:$2 sm:$0xff] %v294
        %s302 = scalar_lea.vmem [#allocation1], 32
        %303 = vst [vmem:[%s302] ss:$2 sm:$0xff] %v295
        %v304 = vld.sshfl [vmem:[#allocation1] sm:$0xff pattern:$0x75643120]
        %v306 = vld.sshfl [vmem:[#allocation1 + $0x8] sm:$0xff pattern:$0x75643120]
        %v308 = vld.sshfl [vmem:[#allocation1 + $0x10] sm:$0xff pattern:$0x75643120]
        %v310 = vld.sshfl [vmem:[#allocation1 + $0x18] sm:$0xff pattern:$0x75643120]
        %v312 = vld.sshfl [vmem:[#allocation1 + $0x20] sm:$0xff pattern:$0x75643120]
        %314 = vrot.lane.b32.xlu0 %v304, 126
        %v315 = vpop.permute.xlu0 %314
        %316 = vrot.lane.b32.xlu0 %v306, 126
        %v317 = vpop.permute.xlu0 %316
        %318 = vrot.lane.b32.xlu0 %v308, 126
        %v319 = vpop.permute.xlu0 %318
        %320 = vrot.lane.b32.xlu0 %v310, 126
        %v321 = vpop.permute.xlu0 %320
        %322 = vrot.lane.b32.xlu0 %v312, 126
        %v323 = vpop.permute.xlu0 %322
        %v324 = vrot.slane %v315, 4
        %v325 = vrot.slane %v317, 4
        %v326 = vrot.slane %v319, 4
        %v327 = vrot.slane %v321, 4
        %v328 = vrot.slane %v323, 4
        %v329 = vsel %vm272, %v324, %v325
        %vm330 = vcmask 1031168
        %v331 = vsel %vm330, %v315, %v329
        %v332 = vsel %vm272, %v325, %v326
        %v333 = vsel %vm330, %v317, %v332
        %v334 = vsel %vm272, %v326, %v327
        %v335 = vsel %vm330, %v319, %v334
        %v336 = vsel %vm272, %v327, %v328
        %v337 = vsel %vm330, %v321, %v336
        %343 = vst [vmem:[#allocation2 + $0x24] sm:$0x33] %v331
        %344 = vst [vmem:[#allocation2 + $0x2c] sm:$0x33] %v333
        %345 = vst [vmem:[#allocation2 + $0x34] sm:$0x33] %v335
        %346 = vst [vmem:[#allocation2 + $0x3c] sm:$0x33] %v337
        %347 = vst.msk [vmem:[#allocation2 + $0x44] sm:$0x3] %vm233, %v323
        %v348 = vld [vmem:[%s183] sm:$0xff]
        %v349 = vld [vmem:[%s183 + $0x8] sm:$0xff]
        %v350 = vld [vmem:[%s183 + $0x10] sm:$0x3]
        %s352 = scalar_lea.vmem [#allocation1], 1
        %353 = vst [vmem:[%s352] ss:$2 sm:$0xff] %v348
        %s355 = scalar_lea.vmem [#allocation1], 17
        %356 = vst [vmem:[%s355] ss:$2 sm:$0xff] %v349
        %s358 = scalar_lea.vmem [#allocation1], 33
        %359 = vst [vmem:[%s358] ss:$2 sm:$0xff] %v350
        %v360 = vld.sshfl [vmem:[#allocation1] sm:$0xff pattern:$0x75643120]
        %v362 = vld.sshfl [vmem:[#allocation1 + $0x8] sm:$0xff pattern:$0x75643120]
        %v364 = vld.sshfl [vmem:[#allocation1 + $0x10] sm:$0xff pattern:$0x75643120]
        %v366 = vld.sshfl [vmem:[#allocation1 + $0x18] sm:$0xff pattern:$0x75643120]
        %v368 = vld.sshfl [vmem:[#allocation1 + $0x20] sm:$0xff pattern:$0x75643120]
        %370 = vrot.lane.b32.xlu0 %v360, 94
        %v371 = vpop.permute.xlu0 %370
        %372 = vrot.lane.b32.xlu0 %v362, 94
        %v373 = vpop.permute.xlu0 %372
        %374 = vrot.lane.b32.xlu0 %v364, 94
        %v375 = vpop.permute.xlu0 %374
        %376 = vrot.lane.b32.xlu0 %v366, 94
        %v377 = vpop.permute.xlu0 %376
        %378 = vrot.lane.b32.xlu0 %v368, 94
        %v379 = vpop.permute.xlu0 %378
        %v380 = vrot.slane %v371, 4
        %v381 = vrot.slane %v373, 4
        %v382 = vrot.slane %v375, 4
        %v383 = vrot.slane %v377, 4
        %v384 = vrot.slane %v379, 4
        %v385 = vsel %vm272, %v380, %v381
        %vm386 = vcmask 769024
        %v387 = vsel %vm386, %v371, %v385
        %v388 = vsel %vm272, %v381, %v382
        %v389 = vsel %vm386, %v373, %v388
        %v390 = vsel %vm272, %v382, %v383
        %v391 = vsel %vm386, %v375, %v390
        %v392 = vsel %vm272, %v383, %v384
        %v393 = vsel %vm386, %v377, %v392
        %399 = vst [vmem:[#allocation2 + $0x24] sm:$0xcc] %v387
        %400 = vst [vmem:[#allocation2 + $0x2c] sm:$0xcc] %v389
        %401 = vst [vmem:[#allocation2 + $0x34] sm:$0xcc] %v391
        %402 = vst [vmem:[#allocation2 + $0x3c] sm:$0xcc] %v393
        %403 = vst.msk [vmem:[#allocation2 + $0x44] sm:$0xc] %vm291, %v379
        %v404 = vld [vmem:[%s183] sm:$0xff]
        %v405 = vld [vmem:[%s183 + $0x8] sm:$0xff]
        %v406 = vld [vmem:[%s183 + $0x10] sm:$0x3]
        %408 = vst [vmem:[#allocation1] ss:$2 sm:$0xff] %v404
        %s410 = scalar_lea.vmem [#allocation1], 16
        %411 = vst [vmem:[%s410] ss:$2 sm:$0xff] %v405
        %s413 = scalar_lea.vmem [#allocation1], 32
        %414 = vst [vmem:[%s413] ss:$2 sm:$0xff] %v406
        %v415 = vld.sshfl [vmem:[#allocation1] sm:$0xff pattern:$0x75643120]
        %v417 = vld.sshfl [vmem:[#allocation1 + $0x8] sm:$0xff pattern:$0x75643120]
        %v419 = vld.sshfl [vmem:[#allocation1 + $0x10] sm:$0xff pattern:$0x75643120]
        %v421 = vld.sshfl [vmem:[#allocation1 + $0x18] sm:$0xff pattern:$0x75643120]
        %v423 = vld.sshfl [vmem:[#allocation1 + $0x20] sm:$0xff pattern:$0x75643120]
        %425 = vrot.lane.b32.xlu0 %v415, 93
        %v426 = vpop.permute.xlu0 %425
        %427 = vrot.lane.b32.xlu0 %v417, 93
        %v428 = vpop.permute.xlu0 %427
        %429 = vrot.lane.b32.xlu0 %v419, 93
        %v430 = vpop.permute.xlu0 %429
        %431 = vrot.lane.b32.xlu0 %v421, 93
        %v432 = vpop.permute.xlu0 %431
        %433 = vrot.lane.b32.xlu0 %v423, 93
        %v434 = vpop.permute.xlu0 %433
        %v435 = vrot.slane %v426, 4
        %v436 = vrot.slane %v428, 4
        %v437 = vrot.slane %v430, 4
        %v438 = vrot.slane %v432, 4
        %v439 = vrot.slane %v434, 4
        %v440 = vsel %vm272, %v435, %v436
        %vm441 = vcmask 760832
        %v442 = vsel %vm441, %v426, %v440
        %v443 = vsel %vm272, %v436, %v437
        %v444 = vsel %vm441, %v428, %v443
        %v445 = vsel %vm272, %v437, %v438
        %v446 = vsel %vm441, %v430, %v445
        %v447 = vsel %vm272, %v438, %v439
        %v448 = vsel %vm441, %v432, %v447
        %454 = vst [vmem:[#allocation2 + $0x48] sm:$0x33] %v442
        %455 = vst [vmem:[#allocation2 + $0x50] sm:$0x33] %v444
        %456 = vst [vmem:[#allocation2 + $0x58] sm:$0x33] %v446
        %457 = vst [vmem:[#allocation2 + $0x60] sm:$0x33] %v448
        %458 = vst.msk [vmem:[#allocation2 + $0x68] sm:$0x3] %vm233, %v434
        %v459 = vld [vmem:[%s183] sm:$0xff]
        %v460 = vld [vmem:[%s183 + $0x8] sm:$0xff]
        %v461 = vld [vmem:[%s183 + $0x10] sm:$0x3]
        %s463 = scalar_lea.vmem [#allocation1], 1
        %464 = vst [vmem:[%s463] ss:$2 sm:$0xff] %v459
        %s466 = scalar_lea.vmem [#allocation1], 17
        %467 = vst [vmem:[%s466] ss:$2 sm:$0xff] %v460
        %s469 = scalar_lea.vmem [#allocation1], 33
        %470 = vst [vmem:[%s469] ss:$2 sm:$0xff] %v461
        %v471 = vld.sshfl [vmem:[#allocation1] sm:$0xff pattern:$0x75643120]
        %v473 = vld.sshfl [vmem:[#allocation1 + $0x8] sm:$0xff pattern:$0x75643120]
        %v475 = vld.sshfl [vmem:[#allocation1 + $0x10] sm:$0xff pattern:$0x75643120]
        %v477 = vld.sshfl [vmem:[#allocation1 + $0x18] sm:$0xff pattern:$0x75643120]
        %v479 = vld.sshfl [vmem:[#allocation1 + $0x20] sm:$0xff pattern:$0x75643120]
        %481 = vrot.lane.b32.xlu0 %v471, 92
        %v482 = vpop.permute.xlu0 %481
        %483 = vrot.lane.b32.xlu0 %v473, 92
        %v484 = vpop.permute.xlu0 %483
        %485 = vrot.lane.b32.xlu0 %v475, 92
        %v486 = vpop.permute.xlu0 %485
        %487 = vrot.lane.b32.xlu0 %v477, 92
        %v488 = vpop.permute.xlu0 %487
        %489 = vrot.lane.b32.xlu0 %v479, 92
        %v490 = vpop.permute.xlu0 %489
        %v491 = vrot.slane %v482, 4
        %v492 = vrot.slane %v484, 4
        %v493 = vrot.slane %v486, 4
        %v494 = vrot.slane %v488, 4
        %v495 = vrot.slane %v490, 4
        %v496 = vsel %vm272, %v491, %v492
        %vm497 = vcmask 752640
        %v498 = vsel %vm497, %v482, %v496
        %v499 = vsel %vm272, %v492, %v493
        %v500 = vsel %vm497, %v484, %v499
        %v501 = vsel %vm272, %v493, %v494
        %v502 = vsel %vm497, %v486, %v501
        %v503 = vsel %vm272, %v494, %v495
        %v504 = vsel %vm497, %v488, %v503
        %510 = vst [vmem:[#allocation2 + $0x48] sm:$0xcc] %v498
        %511 = vst [vmem:[#allocation2 + $0x50] sm:$0xcc] %v500
        %512 = vst [vmem:[#allocation2 + $0x58] sm:$0xcc] %v502
        %513 = vst [vmem:[#allocation2 + $0x60] sm:$0xcc] %v504
        %514 = vst.msk [vmem:[#allocation2 + $0x68] sm:$0xc] %vm291, %v490
        %v515 = vld [vmem:[%s183] sm:$0xff]
        %v516 = vld [vmem:[%s183 + $0x8] sm:$0xff]
        %v517 = vld [vmem:[%s183 + $0x10] sm:$0xf]
        %519 = vst [vmem:[#allocation1] ss:$2 sm:$0xff] %v515
        %s521 = scalar_lea.vmem [#allocation1], 16
        %522 = vst [vmem:[%s521] ss:$2 sm:$0xff] %v516
        %s524 = scalar_lea.vmem [#allocation1], 32
        %525 = vst [vmem:[%s524] ss:$2 sm:$0xff] %v517
        %v526 = vld.sshfl [vmem:[#allocation1] sm:$0xff pattern:$0x75643120]
        %v528 = vld.sshfl [vmem:[#allocation1 + $0x8] sm:$0xff pattern:$0x75643120]
        %v530 = vld.sshfl [vmem:[#allocation1 + $0x10] sm:$0xff pattern:$0x75643120]
        %v532 = vld.sshfl [vmem:[#allocation1 + $0x18] sm:$0xff pattern:$0x75643120]
        %v534 = vld.sshfl [vmem:[#allocation1 + $0x20] sm:$0xff pattern:$0x75643120]
        %536 = vrot.lane.b32.xlu0 %v526, 60
        %v537 = vpop.permute.xlu0 %536
        %538 = vrot.lane.b32.xlu0 %v528, 60
        %v539 = vpop.permute.xlu0 %538
        %540 = vrot.lane.b32.xlu0 %v530, 60
        %v541 = vpop.permute.xlu0 %540
        %542 = vrot.lane.b32.xlu0 %v532, 60
        %v543 = vpop.permute.xlu0 %542
        %544 = vrot.lane.b32.xlu0 %v534, 60
        %v545 = vpop.permute.xlu0 %544
        %v546 = vrot.slane %v537, 4
        %v547 = vrot.slane %v539, 4
        %v548 = vrot.slane %v541, 4
        %v549 = vrot.slane %v543, 4
        %v550 = vrot.slane %v545, 4
        %v551 = vsel %vm272, %v546, %v547
        %vm552 = vcmask 490496
        %v553 = vsel %vm552, %v537, %v551
        %v554 = vsel %vm272, %v547, %v548
        %v555 = vsel %vm552, %v539, %v554
        %v556 = vsel %vm272, %v548, %v549
        %v557 = vsel %vm552, %v541, %v556
        %v558 = vsel %vm272, %v549, %v550
        %v559 = vsel %vm552, %v543, %v558
        %v560 = vsel %vm552, %v545, %v550
        %566 = vst [vmem:[#allocation2 + $0x6c] sm:$0x33] %v553
        %567 = vst [vmem:[#allocation2 + $0x74] sm:$0x33] %v555
        %568 = vst [vmem:[#allocation2 + $0x7c] sm:$0x33] %v557
        %569 = vst [vmem:[#allocation2 + $0x84] sm:$0x33] %v559
        %570 = vst.msk [vmem:[#allocation2 + $0x8c] sm:$0x3] %vm233, %v560
        %v571 = vld [vmem:[%s183] sm:$0xff]
        %v572 = vld [vmem:[%s183 + $0x8] sm:$0xff]
        %v573 = vld [vmem:[%s183 + $0x10] sm:$0xf]
        %s575 = scalar_lea.vmem [#allocation1], 1
        %576 = vst [vmem:[%s575] ss:$2 sm:$0xff] %v571
        %s578 = scalar_lea.vmem [#allocation1], 17
        %579 = vst [vmem:[%s578] ss:$2 sm:$0xff] %v572
        %s581 = scalar_lea.vmem [#allocation1], 33
        %582 = vst [vmem:[%s581] ss:$2 sm:$0xff] %v573
        %v583 = vld.sshfl [vmem:[#allocation1] sm:$0xff pattern:$0x75643120]
        %v585 = vld.sshfl [vmem:[#allocation1 + $0x8] sm:$0xff pattern:$0x75643120]
        %v587 = vld.sshfl [vmem:[#allocation1 + $0x10] sm:$0xff pattern:$0x75643120]
        %v589 = vld.sshfl [vmem:[#allocation1 + $0x18] sm:$0xff pattern:$0x75643120]
        %v591 = vld.sshfl [vmem:[#allocation1 + $0x20] sm:$0xff pattern:$0x75643120]
        %593 = vrot.lane.b32.xlu0 %v583, 59
        %v594 = vpop.permute.xlu0 %593
        %595 = vrot.lane.b32.xlu0 %v585, 59
        %v596 = vpop.permute.xlu0 %595
        %597 = vrot.lane.b32.xlu0 %v587, 59
        %v598 = vpop.permute.xlu0 %597
        %599 = vrot.lane.b32.xlu0 %v589, 59
        %v600 = vpop.permute.xlu0 %599
        %601 = vrot.lane.b32.xlu0 %v591, 59
        %v602 = vpop.permute.xlu0 %601
        %v603 = vrot.slane %v594, 4
        %v604 = vrot.slane %v596, 4
        %v605 = vrot.slane %v598, 4
        %v606 = vrot.slane %v600, 4
        %v607 = vrot.slane %v602, 4
        %v608 = vsel %vm272, %v603, %v604
        %vm609 = vcmask 482304
        %v610 = vsel %vm609, %v594, %v608
        %v611 = vsel %vm272, %v604, %v605
        %v612 = vsel %vm609, %v596, %v611
        %v613 = vsel %vm272, %v605, %v606
        %v614 = vsel %vm609, %v598, %v613
        %v615 = vsel %vm272, %v606, %v607
        %v616 = vsel %vm609, %v600, %v615
        %v617 = vsel %vm609, %v602, %v607
        %623 = vst [vmem:[#allocation2 + $0x6c] sm:$0xcc] %v610
        %624 = vst [vmem:[#allocation2 + $0x74] sm:$0xcc] %v612
        %625 = vst [vmem:[#allocation2 + $0x7c] sm:$0xcc] %v614
        %626 = vst [vmem:[#allocation2 + $0x84] sm:$0xcc] %v616
        %627 = vst.msk [vmem:[#allocation2 + $0x8c] sm:$0xc] %vm291, %v617
        %v628 = vld [vmem:[%s183] sm:$0xff]
        %v629 = vld [vmem:[%s183 + $0x8] sm:$0xff]
        %v630 = vld [vmem:[%s183 + $0x10] sm:$0xf]
        %632 = vst [vmem:[#allocation1] ss:$2 sm:$0xff] %v628
        %s634 = scalar_lea.vmem [#allocation1], 16
        %635 = vst [vmem:[%s634] ss:$2 sm:$0xff] %v629
        %s637 = scalar_lea.vmem [#allocation1], 32
        %638 = vst [vmem:[%s637] ss:$2 sm:$0xff] %v630
        %v639 = vld.sshfl [vmem:[#allocation1] sm:$0xff pattern:$0x75643120]
        %v641 = vld.sshfl [vmem:[#allocation1 + $0x8] sm:$0xff pattern:$0x75643120]
        %v643 = vld.sshfl [vmem:[#allocation1 + $0x10] sm:$0xff pattern:$0x75643120]
        %v645 = vld.sshfl [vmem:[#allocation1 + $0x18] sm:$0xff pattern:$0x75643120]
        %v647 = vld.sshfl [vmem:[#allocation1 + $0x20] sm:$0xff pattern:$0x75643120]
        %649 = vrot.lane.b32.xlu0 %v639, 58
        %v650 = vpop.permute.xlu0 %649
        %651 = vrot.lane.b32.xlu0 %v641, 58
        %v652 = vpop.permute.xlu0 %651
        %653 = vrot.lane.b32.xlu0 %v643, 58
        %v654 = vpop.permute.xlu0 %653
        %655 = vrot.lane.b32.xlu0 %v645, 58
        %v656 = vpop.permute.xlu0 %655
        %657 = vrot.lane.b32.xlu0 %v647, 58
        %v658 = vpop.permute.xlu0 %657
        %v659 = vrot.slane %v650, 4
        %v660 = vrot.slane %v652, 4
        %v661 = vrot.slane %v654, 4
        %v662 = vrot.slane %v656, 4
        %v663 = vrot.slane %v658, 4
        %v664 = vsel %vm272, %v659, %v660
        %vm665 = vcmask 474112
        %v666 = vsel %vm665, %v650, %v664
        %v667 = vsel %vm272, %v660, %v661
        %v668 = vsel %vm665, %v652, %v667
        %v669 = vsel %vm272, %v661, %v662
        %v670 = vsel %vm665, %v654, %v669
        %v671 = vsel %vm272, %v662, %v663
        %v672 = vsel %vm665, %v656, %v671
        %v673 = vsel %vm665, %v658, %v663
        %679 = vst [vmem:[#allocation2 + $0x90] sm:$0x33] %v666
        %680 = vst [vmem:[#allocation2 + $0x98] sm:$0x33] %v668
        %681 = vst [vmem:[#allocation2 + $0xa0] sm:$0x33] %v670
        %682 = vst [vmem:[#allocation2 + $0xa8] sm:$0x33] %v672
        %683 = vst.msk [vmem:[#allocation2 + $0xb0] sm:$0x3] %vm233, %v673
        %v684 = vld [vmem:[%s1] sm:$0xf]
        %v685 = vld [vmem:[#allocation2] sm:$0xff]
        %v686 = vld [vmem:[#allocation2 + $0x8] sm:$0xff]
        %v687 = vld [vmem:[#allocation2 + $0x10] sm:$0xff]
        %v688 = vld [vmem:[#allocation2 + $0x18] sm:$0xff]
        %v689 = vld [vmem:[#allocation2 + $0x20] sm:$0xf]
        %v690 = vld [vmem:[#allocation2 + $0x24] sm:$0xff]
        %v691 = vld [vmem:[#allocation2 + $0x2c] sm:$0xff]
        %v692 = vld [vmem:[#allocation2 + $0x34] sm:$0xff]
        %v693 = vld [vmem:[#allocation2 + $0x3c] sm:$0xff]
        %v694 = vld [vmem:[#allocation2 + $0x44] sm:$0xf]
        %v695 = vld [vmem:[#allocation2 + $0x48] sm:$0xff]
        %v696 = vld [vmem:[#allocation2 + $0x50] sm:$0xff]
        %v697 = vld [vmem:[#allocation2 + $0x58] sm:$0xff]
        %v698 = vld [vmem:[#allocation2 + $0x60] sm:$0xff]
        %v699 = vld [vmem:[#allocation2 + $0x68] sm:$0xf]
        %v700 = vld [vmem:[#allocation2 + $0x6c] sm:$0xff]
        %v701 = vld [vmem:[#allocation2 + $0x74] sm:$0xff]
        %v702 = vld [vmem:[#allocation2 + $0x7c] sm:$0xff]
        %v703 = vld [vmem:[#allocation2 + $0x84] sm:$0xff]
        %v704 = vld [vmem:[#allocation2 + $0x8c] sm:$0xf]
        %v705 = vld [vmem:[#allocation2 + $0x90] sm:$0x33]
        %v706 = vld [vmem:[#allocation2 + $0x98] sm:$0x33]
        %v707 = vld [vmem:[#allocation2 + $0xa0] sm:$0x33]
        %v708 = vld [vmem:[#allocation2 + $0xa8] sm:$0x33]
        %v709 = vld [vmem:[#allocation2 + $0xb0] sm:$0x3]
        %v710 = vld [vmem:[%s2] sm:$0xff]
        %712 = vset.pattern.permute.xlu0 0
        %713 = vperm.xlu0 %712, %v710
        %v714 = vpop.permute.xlu0 %713
        %v741 = vunpack.c.l.b16 %v685
        %v742 = vunpack.c.h.b16 %v685
        %v743 = vunpack.c.l.b16 %v686
        %v744 = vunpack.c.h.b16 %v686
        %v745 = vunpack.c.l.b16 %v687
        %v746 = vunpack.c.h.b16 %v687
        %v747 = vunpack.c.l.b16 %v688
        %v748 = vunpack.c.h.b16 %v688
        %v749 = vunpack.c.l.b16 %v689
        %v750 = vunpack.c.l.b16 %v690
        %v751 = vunpack.c.h.b16 %v690
        %v752 = vunpack.c.l.b16 %v691
        %v753 = vunpack.c.h.b16 %v691
        %v754 = vunpack.c.l.b16 %v692
        %v755 = vunpack.c.h.b16 %v692
        %v756 = vunpack.c.l.b16 %v693
        %v757 = vunpack.c.h.b16 %v693
        %v758 = vunpack.c.l.b16 %v694
        %v759 = vunpack.c.l.b16 %v695
        %v760 = vunpack.c.h.b16 %v695
        %v761 = vunpack.c.l.b16 %v696
        %v762 = vunpack.c.h.b16 %v696
        %v763 = vunpack.c.l.b16 %v697
        %v764 = vunpack.c.h.b16 %v697
        %v765 = vunpack.c.l.b16 %v698
        %v766 = vunpack.c.h.b16 %v698
        %v767 = vunpack.c.l.b16 %v699
        %v768 = vunpack.c.l.b16 %v700
        %v769 = vunpack.c.h.b16 %v700
        %v770 = vunpack.c.l.b16 %v701
        %v771 = vunpack.c.h.b16 %v701
        %v772 = vunpack.c.l.b16 %v702
        %v773 = vunpack.c.h.b16 %v702
        %v774 = vunpack.c.l.b16 %v703
        %v775 = vunpack.c.h.b16 %v703
        %v776 = vunpack.c.l.b16 %v704
        %v777 = vunpack.c.l.b16 %v705
        %v778 = vunpack.c.h.b16 %v705
        %v779 = vunpack.c.l.b16 %v706
        %v780 = vunpack.c.h.b16 %v706
        %v781 = vunpack.c.l.b16 %v707
        %v782 = vunpack.c.h.b16 %v707
        %v783 = vunpack.c.l.b16 %v708
        %v784 = vunpack.c.h.b16 %v708
        %v785 = vunpack.c.l.b16 %v709
        %v786 = vpack.c.b16 %v750, %v741
        %v787 = vpack.c.b16 %v751, %v742
        %v788 = vpack.c.b16 %v752, %v743
        %v789 = vpack.c.b16 %v753, %v744
        %v790 = vpack.c.b16 %v754, %v745
        %v791 = vpack.c.b16 %v755, %v746
        %v792 = vpack.c.b16 %v756, %v747
        %v793 = vpack.c.b16 %v757, %v748
        %v794 = vpack.c.b16 %v758, %v749
        %v795 = vpack.c.b16 %v768, %v759
        %v796 = vpack.c.b16 %v769, %v760
        %v797 = vpack.c.b16 %v770, %v761
        %v798 = vpack.c.b16 %v771, %v762
        %v799 = vpack.c.b16 %v772, %v763
        %v800 = vpack.c.b16 %v773, %v764
        %v801 = vpack.c.b16 %v774, %v765
        %v802 = vpack.c.b16 %v775, %v766
        %v803 = vpack.c.b16 %v776, %v767
        %v804 = vpack.c.b16 %v777, %v777
        %v805 = vpack.c.b16 %v778, %v778
        %v806 = vpack.c.b16 %v779, %v779
        %v807 = vpack.c.b16 %v780, %v780
        %v808 = vpack.c.b16 %v781, %v781
        %v809 = vpack.c.b16 %v782, %v782
        %v810 = vpack.c.b16 %v783, %v783
        %v811 = vpack.c.b16 %v784, %v784
        %v812 = vpack.c.b16 %v785, %v785
        %vm831 = vcmask 293888
        %v833 = vsel %vm831, %v684, 0
        %vm835 = vcmask 1041408
        %v837 = vsel %vm835, %v804, 0
        %v840 = vsel %vm835, %v805, 0
        %v843 = vsel %vm835, %v806, 0
        %v846 = vsel %vm835, %v807, 0
        %v849 = vsel %vm835, %v808, 0
        %v852 = vsel %vm835, %v809, 0
        %v855 = vsel %vm835, %v810, 0
        %v858 = vsel %vm835, %v811, 0
        %v861 = vsel %vm835, %v812, 0
        %863 = vmatpush.bf16.msra.mxu0 0
        %864 = vmatpush.bf16.msra.mxu0 0
        %865 = vmatpush.bf16.msra.mxu0 0
        %866 = vmatpush.bf16.msra.mxu0 0
        %867 = vmatpush.bf16.msra.mxu0 0
        %868 = vmatpush.bf16.msra.mxu0 %v837
        %869 = vmatpush.bf16.msra.mxu0 %v795
        %870 = vmatpush.bf16.msra.mxu0 %v786
        %871 = vmatmul.bf16.gmra.mxu0 %v833
        %v872 = vpop.f32.mrf.mxu0
        %v873 = vadd.f32 %v714, %v872
        %v874 = vpop.f32.mrf.mxu0
        %875 = vdwg.mxu0
        %876 = vmatpush.bf16.msra.mxu0 0
        %877 = vmatpush.bf16.msra.mxu0 0
        %878 = vmatpush.bf16.msra.mxu0 0
        %879 = vmatpush.bf16.msra.mxu0 0
        %880 = vmatpush.bf16.msra.mxu0 0
        %881 = vmatpush.bf16.msra.mxu0 %v840
        %882 = vmatpush.bf16.msra.mxu0 %v796
        %883 = vmatpush.bf16.msra.mxu0 %v787
        %884 = vmatmul.bf16.gmra.mxu0 %v833
        %v885 = vpop.f32.mrf.mxu0
        %v886 = vadd.f32 %v714, %v885
        %v887 = vpop.f32.mrf.mxu0
        %888 = vdwg.mxu0
        %889 = vmatpush.bf16.msra.mxu0 0
        %890 = vmatpush.bf16.msra.mxu0 0
        %891 = vmatpush.bf16.msra.mxu0 0
        %892 = vmatpush.bf16.msra.mxu0 0
        %893 = vmatpush.bf16.msra.mxu0 0
        %894 = vmatpush.bf16.msra.mxu0 %v843
        %895 = vmatpush.bf16.msra.mxu0 %v797
        %896 = vmatpush.bf16.msra.mxu0 %v788
        %897 = vmatmul.bf16.gmra.mxu0 %v833
        %v898 = vpop.f32.mrf.mxu0
        %v899 = vadd.f32 %v714, %v898
        %v900 = vpop.f32.mrf.mxu0
        %901 = vdwg.mxu0
        %902 = vmatpush.bf16.msra.mxu0 0
        %903 = vmatpush.bf16.msra.mxu0 0
        %904 = vmatpush.bf16.msra.mxu0 0
        %905 = vmatpush.bf16.msra.mxu0 0
        %906 = vmatpush.bf16.msra.mxu0 0
        %907 = vmatpush.bf16.msra.mxu0 %v846
        %908 = vmatpush.bf16.msra.mxu0 %v798
        %909 = vmatpush.bf16.msra.mxu0 %v789
        %910 = vmatmul.bf16.gmra.mxu0 %v833
        %v911 = vpop.f32.mrf.mxu0
        %v912 = vadd.f32 %v714, %v911
        %v913 = vpop.f32.mrf.mxu0
        %914 = vdwg.mxu0
        %915 = vmatpush.bf16.msra.mxu0 0
        %916 = vmatpush.bf16.msra.mxu0 0
        %917 = vmatpush.bf16.msra.mxu0 0
        %918 = vmatpush.bf16.msra.mxu0 0
        %919 = vmatpush.bf16.msra.mxu0 0
        %920 = vmatpush.bf16.msra.mxu0 %v849
        %921 = vmatpush.bf16.msra.mxu0 %v799
        %922 = vmatpush.bf16.msra.mxu0 %v790
        %923 = vmatmul.bf16.gmra.mxu0 %v833
        %v924 = vpop.f32.mrf.mxu0
        %v925 = vadd.f32 %v714, %v924
        %v926 = vpop.f32.mrf.mxu0
        %927 = vdwg.mxu0
        %928 = vmatpush.bf16.msra.mxu0 0
        %929 = vmatpush.bf16.msra.mxu0 0
        %930 = vmatpush.bf16.msra.mxu0 0
        %931 = vmatpush.bf16.msra.mxu0 0
        %932 = vmatpush.bf16.msra.mxu0 0
        %933 = vmatpush.bf16.msra.mxu0 %v852
        %934 = vmatpush.bf16.msra.mxu0 %v800
        %935 = vmatpush.bf16.msra.mxu0 %v791
        %936 = vmatmul.bf16.gmra.mxu0 %v833
        %v937 = vpop.f32.mrf.mxu0
        %v938 = vadd.f32 %v714, %v937
        %v939 = vpop.f32.mrf.mxu0
        %940 = vdwg.mxu0
        %941 = vmatpush.bf16.msra.mxu0 0
        %942 = vmatpush.bf16.msra.mxu0 0
        %943 = vmatpush.bf16.msra.mxu0 0
        %944 = vmatpush.bf16.msra.mxu0 0
        %945 = vmatpush.bf16.msra.mxu0 0
        %946 = vmatpush.bf16.msra.mxu0 %v855
        %947 = vmatpush.bf16.msra.mxu0 %v801
        %948 = vmatpush.bf16.msra.mxu0 %v792
        %949 = vmatmul.bf16.gmra.mxu0 %v833
        %v950 = vpop.f32.mrf.mxu0
        %v951 = vadd.f32 %v714, %v950
        %v952 = vpop.f32.mrf.mxu0
        %953 = vdwg.mxu0
        %954 = vmatpush.bf16.msra.mxu0 0
        %955 = vmatpush.bf16.msra.mxu0 0
        %956 = vmatpush.bf16.msra.mxu0 0
        %957 = vmatpush.bf16.msra.mxu0 0
        %958 = vmatpush.bf16.msra.mxu0 0
        %959 = vmatpush.bf16.msra.mxu0 %v858
        %960 = vmatpush.bf16.msra.mxu0 %v802
        %961 = vmatpush.bf16.msra.mxu0 %v793
        %962 = vmatmul.bf16.gmra.mxu0 %v833
        %v963 = vpop.f32.mrf.mxu0
        %v964 = vadd.f32 %v714, %v963
        %v965 = vpop.f32.mrf.mxu0
        %966 = vdwg.mxu0
        %967 = vmatpush.bf16.msra.mxu0 0
        %968 = vmatpush.bf16.msra.mxu0 0
        %969 = vmatpush.bf16.msra.mxu0 0
        %970 = vmatpush.bf16.msra.mxu0 0
        %971 = vmatpush.bf16.msra.mxu0 0
        %972 = vmatpush.bf16.msra.mxu0 %v861
        %973 = vmatpush.bf16.msra.mxu0 %v803
        %974 = vmatpush.bf16.msra.mxu0 %v794
        %975 = vmatmul.bf16.gmra.mxu0 %v833
        %v976 = vpop.f32.mrf.mxu0
        %v977 = vadd.f32 %v714, %v976
        %v978 = vpop.f32.mrf.mxu0
        %979 = vdwg.mxu0
        %980 = vst [vmem:[%s206] sm:$0xff] %v873
        %981 = vst [vmem:[%s206 + $0x8] sm:$0xff] %v886
        %982 = vst [vmem:[%s206 + $0x10] sm:$0xff] %v899
        %983 = vst [vmem:[%s206 + $0x18] sm:$0xff] %v912
        %984 = vst [vmem:[%s206 + $0x20] sm:$0xff] %v925
        %985 = vst [vmem:[%s206 + $0x28] sm:$0xff] %v938
        %986 = vst [vmem:[%s206 + $0x30] sm:$0xff] %v951
        %987 = vst [vmem:[%s206 + $0x38] sm:$0xff] %v964
        %vm988 = vcmask 523264
        %989 = vst.msk [vmem:[%s206 + $0x40] sm:$0xff] %vm988, %v977
        %s990 = sand.u32 %s112, 1
        %s991 = scalar_lea.sflag [#allocation5], %s990
        %s992 = sand.u32 %s112, 1
        %s993 = smul.addr %s992, 72
        %s994 = scalar_lea.vmem [#allocation6], %s993
        // Predicated region
        $region37: #{tpu_custom_call.1} parent=31 // pred_check
          %p995 = pneg %p122
        $region38: #{tpu_custom_call.1} parent=31 // pred_check_branch
          %997 = sbr.rel (%p995) target = $region40
        $region39: #{tpu_custom_call.1} parent=31 // pred_region
          %999 = vsyncadd %s991, 0
          %s1000 = smul.addr %s25, 9
          %s1001 = smul.addr %s24, 9
          %s1002 = sadd.s32 %s1000, %s1001
          %s1003 = smul.addr %s1002, 8
          %s1004 = scalar_lea.hbm %s3, %s1003
          %s1006 = sshll.u32 %s994, 4
          %s1007 = int_to_ptr.vmem [resolvable:$true] %s1006
          %s1008 = sshll.u32 %s1004, 4
          %s1009 = int_to_ptr.hbm [resolvable:$true] %s1008
          %1011 = dma.vmem_to_hbm [thread:$0]  %s1007, 1152, %s1009, %s991
        $region40: #{tpu_custom_call.1} parent=31 // pred_fallthru
          _
      $region32: #{tpu_custom_call.1} parent=5 // pred_fallthru
        _
      %p1012 = scmp.le.s32.totalorder 2, %s15
      // Predicated region
      $region41: #{tpu_custom_call.1} parent=5 // pred_check
        %p1013 = pneg %p1012
      $region42: #{tpu_custom_call.1} parent=5 // pred_check_branch
        %1015 = sbr.rel (%p1013) target = $region44
      $region43: #{tpu_custom_call.1} parent=5 // pred_region
        %s1016 = ssub.s32 %s15, 2
        // Predicated region
        $region45: #{tpu_custom_call.1} parent=43 // pred_check
          %p1017 = pneg %p128
        $region46: #{tpu_custom_call.1} parent=43 // pred_check_branch
          %1019 = sbr.rel (%p1017) target = $region48
        $region47: #{tpu_custom_call.1} parent=43 // pred_region
          %s1020 = sand.u32 %s113, 1
          %s1021 = scalar_lea.sflag [#allocation5], %s1020
          %s1022 = sand.u32 %s113, 1
          %s1023 = smul.addr %s1022, 72
          %s1024 = scalar_lea.vmem [#allocation6], %s1023
          %1026 = dma.done %s1021, 1152
        $region48: #{tpu_custom_call.1} parent=43 // pred_fallthru
          _
      $region44: #{tpu_custom_call.1} parent=5 // pred_fallthru
        _
    $region6: #{tpu_custom_call.1} parent=1 // loop_footer
      %s19 = sadd.s32 1, %s15
    $region7: #{tpu_custom_call.1} parent=1 // loop_footer_branch
      %14 = sbr.rel target = $region3
    $region8: #{tpu_custom_call.1} parent=1 // loop_exit
      _
    %1027 = vsyncpa [#allocation4], 1
    %s1028 = scalar_lea.sflag [#allocation4], 1
    %1029 = vsyncpa %s1028, 1
    %1030 = vsyncpa [#allocation5], 1
    %s1031 = scalar_lea.sflag [#allocation5], 1
    %1032 = vsyncpa %s1031, 1

</llo_original>
